<compile_context>
chip_gen: v7x
topology: tpu7x:2x2x1
jax: 0.10.0
libtpu: 0.0.40
codegen_flags: <defaults>
</compile_context>

<pallas_src>
import jax
import jax.numpy as jnp
from jax.experimental import pallas as pl
from jax.experimental.pallas import tpu as pltpu


def _copy_kernel(x_ref, o_ref):
    # Pure identity copy of the current tile (flatten is metadata-only).
    o_ref[...] = x_ref[...]


def _pick_lane_dense_view(total_elems):
    """Pick (rows, cols) with cols % 128 == 0 and rows % 8 == 0, if possible."""
    for cols in (8192, 4096, 2048, 1024, 512, 256, 128):
        if total_elems % cols == 0 and (total_elems // cols) % 8 == 0:
            return total_elems // cols, cols
    return None


def flatten_forward(x):
    """Equivalent of torch.flatten(x, 1) for an N-d input, via a Pallas copy."""
    n = x.shape[0]
    flat = 1
    for d in x.shape[1:]:
        flat *= d
    total = n * flat
    itemsize = jnp.dtype(x.dtype).itemsize

    # Metadata-only flatten (row-major, identical to torch.flatten(x, 1)).
    x2d = x.reshape(n, flat)

    view = _pick_lane_dense_view(total)
    if view is None:
        # Fallback: full-extent block (both dims equal the array dims, so the
        # (8,128) divisibility constraint does not apply). Correct for any shape.
        rows, cols = n, flat
        br, bc = n, flat
    else:
        rows, cols = view
        bc = cols
        # Budget ~2 MiB per block: safe on v5e's 16 MiB scoped VMEM default with
        # double-buffered input + output (4 buffers), and leaves headroom on
        # v6e (32 MiB scoped) and v7x (64 MiB physical).
        budget_bytes = 2 * 1024 * 1024
        br = (budget_bytes // (bc * itemsize)) // 8 * 8
        br = max(8, min(rows, br))

    xv = x2d.reshape(rows, cols)
    grid = (pl.cdiv(rows, br), pl.cdiv(cols, bc))

    out = pl.pallas_call(
        _copy_kernel,
        out_shape=jax.ShapeDtypeStruct((rows, cols), x.dtype),
        grid_spec=pltpu.PrefetchScalarGridSpec(
            num_scalar_prefetch=0,
            grid=grid,
            in_specs=[pl.BlockSpec((br, bc), lambda i, j: (i, j))],
            out_specs=pl.BlockSpec((br, bc), lambda i, j: (i, j)),
        ),
        compiler_params=pltpu.CompilerParams(
            # No reduction axis: both grid axes are independent -> megacore / 2-TC
            # sharding allowed (matters on v7x).
            dimension_semantics=("parallel", "parallel"),
        ),
        # Bandwidth-only op: zero flops, read + write of every byte.
        cost_estimate=pl.CostEstimate(
            flops=0, transcendentals=0, bytes_accessed=2 * total * itemsize
        ),
        # Output aliases the input buffer (no fresh HBM allocation / writeback
        # when the caller donates the input under jit).
        input_output_aliases={0: 0},
    )(xv)

    # Metadata-only reshape back to torch.flatten(x, 1) semantics.
    return out.reshape(n, flat)


if __name__ == "__main__":
    key = jax.random.PRNGKey(0)
    # Small NCHW input: batch=2, channels=4, spatial=16x16.
    x = jax.random.normal(key, (2, 4, 16, 16), dtype=jnp.float32)

    # Reference (same semantics as torch.flatten(x, 1)).
    ref = x.reshape(x.shape[0], -1)

    y = flatten_forward(x)
    y = jax.block_until_ready(y)

    assert y.shape == (2, 4 * 16 * 16), y.shape
    assert jnp.array_equal(y, ref), "mismatch vs reference flatten"

    print("KERNEL_OK")
</pallas_src>

<mosaic_0001>
module attributes {stable_mosaic.version = 11 : i64} {
  func.func @_copy_kernel(%arg0: i32, %arg1: i32, %arg2: memref<8x256xf32, #tpu.memory_space<vmem>>, %arg3: memref<8x256xf32, #tpu.memory_space<vmem>>) attributes {dimension_semantics = [#tpu.dimension_semantics<parallel>, #tpu.dimension_semantics<parallel>], iteration_bounds = array<i64: 1, 1>, scalar_prefetch = 0 : i64, scratch_operands = 0 : i64, tpu.core_type = #tpu.core_type<tc>, window_params = [{transform_indices = @transform_0, window_bounds = array<i64: 8, 256>}, {transform_indices = @transform_1, window_bounds = array<i64: 8, 256>}]} {
    %c0 = arith.constant 0 : index
    %c0_0 = arith.constant 0 : index
    %0 = vector.load %arg2[%c0, %c0_0] : memref<8x256xf32, #tpu.memory_space<vmem>>, vector<8x256xf32>
    %c0_1 = arith.constant 0 : index
    %c0_2 = arith.constant 0 : index
    %1 = vector.load %arg3[%c0_1, %c0_2] : memref<8x256xf32, #tpu.memory_space<vmem>>, vector<8x256xf32>
    tpu.vector_store %arg3[%c0_1, %c0_2], %0 {strides = array<i32>} : memref<8x256xf32, #tpu.memory_space<vmem>>, vector<8x256xf32>,
    return
  }
  func.func @transform_0(%arg0: i32, %arg1: i32) -> (i32, i32) {
    %c0_i32 = arith.constant 0 : i32
    return %arg0, %arg1 : i32, i32
  }
  func.func @transform_1(%arg0: i32, %arg1: i32) -> (i32, i32) {
    %c0_i32 = arith.constant 0 : i32
    return %arg0, %arg1 : i32, i32
  }
}

</mosaic_0001>

<llo_original>
// kernel: tpu_custom_call.1
$region0: #{tpu_custom_call.1}
  #allocation0 [shape = 'u32[]', space=smem, size = 0x4, offset = 0x4, fixed_abs, tag = 'smem constant byte address 0x4 - core index']
  #allocation1 [shape = 'u32[144,128]{1,0:T(1,128)}', space=vmem, size = 0x12000, scoped, tag = 'internal scratch']
  %s0 = inlined_call_operand.hbm [shape: f32[8,256], index: 0, kind: input, shape index: {}, may-alias: {0,1}]
  %s1 = inlined_call_operand.hbm [shape: f32[8,256], index: 1, kind: output, shape index: {}, may-alias: {0,1}]
  %s2 = sld [smem:[#allocation0]]
  $region18: #{tpu_custom_call.1} parent=0
    _
  %s4 = ssub.s32 1, %s2
  %s5 = scalar_select 0, %s4, %s2
  $region1: #{tpu_custom_call.1} parent=0
    #allocation2 [shape = 'u8[8192]{0}', space=vmem, size = 0x2000, scoped, tag = 'input window, operand 0, single buffered']
    #allocation3 [shape = 's32[1]{0}', space=sflag, size = 0x4, scoped, tag = 'scoped memory for tpu_custom_call.1']
    #allocation4 [shape = 's32[1]{0}', space=sflag, size = 0x4, scoped, tag = 'scoped memory for tpu_custom_call.1']
    #allocation5 [shape = 'u8[8192]{0}', space=vmem, size = 0x2000, scoped, tag = 'output window, operand 0, single buffered']
    %6 = vsyncpa [#allocation3], 0
    %7 = vsyncpa [#allocation4], 0
    // Predicated region
    $region2: #{tpu_custom_call.1} parent=1 // pred_check
      _
    $region3: #{tpu_custom_call.1} parent=1 // pred_check_branch
      %9 = sbr.rel (0) target = $region5
    $region4: #{tpu_custom_call.1} parent=1 // pred_region
      %s11 = ssub.s32 256, 256
      %12 = vsyncadd [#allocation3], %s11
      %s14 = sshll.u32 [#allocation2], 4
      %s15 = int_to_ptr.vmem [resolvable:$true] %s14
      %17 = dma.hbm_to_vmem [thread:$0]  %s0, 256, %s15, [#allocation3]
    $region5: #{tpu_custom_call.1} parent=1 // pred_fallthru
      _
    // Predicated region
    $region6: #{tpu_custom_call.1} parent=1 // pred_check
      _
    $region7: #{tpu_custom_call.1} parent=1 // pred_check_branch
      %19 = sbr.rel (0) target = $region9
    $region8: #{tpu_custom_call.1} parent=1 // pred_region
      %20 = dma.done [#allocation3], 256
    $region9: #{tpu_custom_call.1} parent=1 // pred_fallthru
      _
    %v21 = vld [vmem:[#allocation2] sm:$0xff]
    %v22 = vld [vmem:[#allocation2 + $0x8] sm:$0xff]
    %23 = vst [vmem:[#allocation5] sm:$0xff] %v21
    %24 = vst [vmem:[#allocation5 + $0x8] sm:$0xff] %v22
    // Predicated region
    $region10: #{tpu_custom_call.1} parent=1 // pred_check
      _
    $region11: #{tpu_custom_call.1} parent=1 // pred_check_branch
      %26 = sbr.rel (0) target = $region13
    $region12: #{tpu_custom_call.1} parent=1 // pred_region
      %s28 = ssub.s32 256, 256
      %29 = vsyncadd [#allocation4], %s28
      %s31 = sshll.u32 [#allocation5], 4
      %s32 = int_to_ptr.vmem [resolvable:$true] %s31
      %34 = dma.vmem_to_hbm [thread:$0]  %s32, 256, %s1, [#allocation4]
    $region13: #{tpu_custom_call.1} parent=1 // pred_fallthru
      _
    // Predicated region
    $region14: #{tpu_custom_call.1} parent=1 // pred_check
      _
    $region15: #{tpu_custom_call.1} parent=1 // pred_check_branch
      %36 = sbr.rel (0) target = $region17
    $region16: #{tpu_custom_call.1} parent=1 // pred_region
      %37 = dma.done [#allocation4], 256
    $region17: #{tpu_custom_call.1} parent=1 // pred_fallthru
      _
    %38 = vsyncpa [#allocation3], 1
    %39 = vsyncpa [#allocation4], 1

</llo_original>
